<compile_context>
chip_gen: v7x
topology: tpu7x:2x2x1
jax: 0.10.0
libtpu: 0.0.40
codegen_flags: <defaults>
</compile_context>

<pallas_src>
import jax
import jax.numpy as jnp
from jax.experimental import pallas as pl
from jax.experimental.pallas import tpu as pltpu

_CHUNK_COLS = 1024  # lane-axis slice processed per inner-loop iteration


def _outconv_kernel(x_ref, w_ref, b_ref, o_ref):
    # x_ref: (BN, C_in, TM)   w_ref: (C_out, C_in)   b_ref: (C_out, 1)
    # o_ref: (BN, C_out, TM)
    bn, c_in, tm = x_ref.shape
    out_dt = o_ref.dtype
    chunk = min(_CHUNK_COLS, tm)
    n_full, rem = divmod(tm, chunk)

    # Tiny, grid-resident parameters (constant index_map keeps them in VMEM).
    w = w_ref[...].astype(jnp.float32)      # (C_out, C_in)
    b = b_ref[...].astype(jnp.float32)      # (C_out, 1)

    def do_chunk(bi, start, size):
        # Per-chunk load + cast keeps vreg pressure bounded; bias is folded
        # into the accumulator init (no full-tile broadcast temporaries).
        xs = x_ref[bi, :, pl.ds(start, size)].astype(jnp.float32)  # (C_in, size)
        acc = xs[0:1, :] * w[:, 0:1] + b                            # (C_out, size)
        for c in range(1, c_in):                                    # static unroll
            acc = acc + xs[c:c + 1, :] * w[:, c:c + 1]
        o_ref[bi, :, pl.ds(start, size)] = acc.astype(out_dt)

    @pl.loop(0, bn)
    def _(bi):
        @pl.loop(0, n_full)
        def _(i):
            start = i * chunk
            if chunk % 128 == 0:
                start = pl.multiple_of(start, 128)
            do_chunk(bi, start, chunk)

        if rem:  # static tail: only when the spatial tile is a full, odd HW
            do_chunk(bi, n_full * chunk, rem)


def outconv_1x1(x_nchw, weight, bias, *, cols_per_step=131072):
    """1x1 conv forward (== torch.nn.Conv2d(in_ch, out_ch, 1)(x)).

    x_nchw : (N, C_in, H, W)
    weight : (C_out, C_in, 1, 1)   -- torch Conv2d layout
    bias   : (C_out,)
    returns (N, C_out, H, W)
    """
    N, C_in, H, W = x_nchw.shape
    C_out = weight.shape[0]
    HW = H * W

    # Free reshapes, no transposes.
    x3d = x_nchw.reshape(N, C_in, HW)          # (N, C_in, HW)
    w2d = weight.reshape(C_out, C_in)          # (C_out, C_in)
    b2d = bias.reshape(C_out, 1)               # (C_out, 1)

    out_dtype = x_nchw.dtype
    in_b = jnp.dtype(x_nchw.dtype).itemsize
    out_b = jnp.dtype(out_dtype).itemsize

    # Columns per grid step, capped so the double-buffered (in + out) blocks
    # stay well inside every generation's VMEM (v7x: 64 MiB physical).
    vmem_budget = 40 * 1024 * 1024
    bytes_per_col = 2 * (C_in * in_b + C_out * out_b)   # x2 = double buffering
    cols_cap = max(128, (vmem_budget // bytes_per_col) // 128 * 128)
    cols = min(cols_per_step, cols_cap)

    # Spatial tile: multiple of 128 (lane-dense, unmasked stores) or the full
    # HW axis.  No jnp.pad: ragged boundary blocks are handled by the Pallas
    # pipeline (OOB columns are never written back to HBM).
    if HW % 128 == 0:
        tm_eff = min(cols, HW)
    elif HW <= cols:
        tm_eff = HW
    else:
        tm_eff = cols

    # Small images: block several batch rows per grid step so the per-step DMA
    # is large enough to amortise the ~0.35 us pipeline overhead.
    BN = 1
    if tm_eff < cols and N > 1:
        BN = min(N, max(1, cols // tm_eff))

    n_grid = pl.cdiv(N, BN)
    s_grid = pl.cdiv(HW, tm_eff)

    # v7x has two TensorCores: avoid a single-step grid when there is enough
    # spatial extent to split.
    if n_grid * s_grid == 1 and HW >= 256:
        tm_eff = max(128, ((HW // 2) // 128) * 128)
        s_grid = pl.cdiv(HW, tm_eff)

    cost = pl.CostEstimate(
        flops=2 * N * HW * C_in * C_out,
        transcendentals=0,
        bytes_accessed=N * HW * (C_in * in_b + C_out * out_b)
        + (C_out * C_in + C_out) * jnp.dtype(weight.dtype).itemsize,
    )

    out3d = pl.pallas_call(
        _outconv_kernel,
        out_shape=jax.ShapeDtypeStruct((N, C_out, HW), out_dtype),
        grid_spec=pltpu.PrefetchScalarGridSpec(
            num_scalar_prefetch=0,
            grid=(n_grid, s_grid),
            in_specs=[
                # x tile: lane-dense along the spatial axis.
                pl.BlockSpec((BN, C_in, tm_eff), lambda n, j: (n, 0, j)),
                # weight / bias: constant index_map -> resident in VMEM.
                pl.BlockSpec((C_out, C_in), lambda n, j: (0, 0)),
                pl.BlockSpec((C_out, 1), lambda n, j: (0, 0)),
            ],
            out_specs=pl.BlockSpec((BN, C_out, tm_eff), lambda n, j: (n, 0, j)),
        ),
        compiler_params=pltpu.CompilerParams(
            dimension_semantics=("parallel", "parallel"),
            vmem_limit_bytes=48 * 1024 * 1024,
        ),
        cost_estimate=cost,
    )(x3d, w2d, b2d)

    return out3d.reshape(N, C_out, H, W)


if __name__ == "__main__":
    key = jax.random.PRNGKey(0)
    k_x, k_w, k_b = jax.random.split(key, 3)

    N, C_in, C_out, H, W = 2, 4, 8, 16, 16

    x = jax.random.normal(k_x, (N, C_in, H, W), dtype=jnp.float32)
    # Deterministic "Conv2d" parameters (torch layout: (out_ch, in_ch, 1, 1)).
    fan_in = C_in * 1 * 1
    bound = 1.0 / (fan_in ** 0.5)
    weight = jax.random.uniform(k_w, (C_out, C_in, 1, 1),
                                minval=-bound, maxval=bound, dtype=jnp.float32)
    bias = jax.random.uniform(k_b, (C_out,),
                              minval=-bound, maxval=bound, dtype=jnp.float32)

    out = outconv_1x1(x, weight, bias)
    jax.block_until_ready(out)

    # Reference check against plain JAX (same math as torch Conv2d 1x1).
    ref = jnp.einsum("nchw,oc->nohw", x, weight.reshape(C_out, C_in)) \
        + bias.reshape(1, C_out, 1, 1)
    assert out.shape == (N, C_out, H, W)
    assert jnp.allclose(out, ref, atol=1e-5, rtol=1e-5)

    print("KERNEL_OK")
</pallas_src>

<mosaic_0001>
module attributes {stable_mosaic.version = 11 : i64} {
  func.func @_outconv_kernel(%arg0: i32, %arg1: i32, %arg2: memref<2x4x128xf32, #tpu.memory_space<vmem>>, %arg3: memref<8x4xf32, #tpu.memory_space<vmem>>, %arg4: memref<8x1xf32, #tpu.memory_space<vmem>>, %arg5: memref<2x8x128xf32, #tpu.memory_space<vmem>>) attributes {dimension_semantics = [#tpu.dimension_semantics<parallel>, #tpu.dimension_semantics<parallel>], iteration_bounds = array<i64: 1, 2>, scalar_prefetch = 0 : i64, scratch_operands = 0 : i64, tpu.core_type = #tpu.core_type<tc>, window_params = [{transform_indices = @transform_0, window_bounds = array<i64: 2, 4, 128>}, {pipeline_mode = #tpu.pipeline_mode<synchronous>, transform_indices = @transform_1, window_bounds = array<i64: 8, 4>}, {pipeline_mode = #tpu.pipeline_mode<synchronous>, transform_indices = @transform_2, window_bounds = array<i64: 8, 1>}, {transform_indices = @transform_3, window_bounds = array<i64: 2, 8, 128>}]} {
    %c0 = arith.constant 0 : index
    %c0_0 = arith.constant 0 : index
    %0 = vector.load %arg3[%c0, %c0_0] : memref<8x4xf32, #tpu.memory_space<vmem>>, vector<8x4xf32>
    %c0_1 = arith.constant 0 : index
    %c0_2 = arith.constant 0 : index
    %1 = vector.load %arg4[%c0_1, %c0_2] : memref<8x1xf32, #tpu.memory_space<vmem>>, vector<8x1xf32>
    %c0_i32 = arith.constant 0 : i32
    %c2_i32 = arith.constant 2 : i32
    %2 = arith.addi %c0_i32, %c2_i32 : i32
    %c1_i32 = arith.constant 1 : i32
    scf.for %arg6 = %c0_i32 to %2 step %c1_i32  : i32 {
      %c1_i32_4 = arith.constant 1 : i32
      %3 = arith.muli %arg6, %c1_i32_4 : i32
      %c0_i32_5 = arith.constant 0 : i32
      %4 = arith.addi %c0_i32_5, %3 : i32
      %c0_i32_6 = arith.constant 0 : i32
      %c1_i32_7 = arith.constant 1 : i32
      %5 = arith.muli %c0_i32_6, %c1_i32_7 : i32
      %c0_i32_8 = arith.constant 0 : i32
      %6 = arith.addi %c0_i32_8, %5 : i32
      %c128_i32 = arith.constant 128 : i32
      %7 = arith.muli %6, %c128_i32 : i32
      %8 = tpu.assume_multiple %7, 128 : i32
      %9 = arith.index_cast %4 : i32 to index
      %c0_9 = arith.constant 0 : index
      %10 = arith.index_cast %8 : i32 to index
      %11 = vector.load %arg2[%9, %c0_9, %10] : memref<2x4x128xf32, #tpu.memory_space<vmem>>, vector<1x4x128xf32>
      %12 = vector.shape_cast %11 : vector<1x4x128xf32> to vector<4x128xf32>
      %13 = vector.extract_strided_slice %12 {offsets = [0, 0], sizes = [1, 128], strides = [1, 1]} : vector<4x128xf32> to vector<1x128xf32>
      %14 = vector.extract_strided_slice %0 {offsets = [0, 0], sizes = [8, 1], strides = [1, 1]} : vector<8x4xf32> to vector<8x1xf32>
      %15 = vector.broadcast %13 : vector<1x128xf32> to vector<8x128xf32>
      %16 = vector.broadcast %14 : vector<8x1xf32> to vector<8x128xf32>
      %17 = arith.mulf %15, %16 : vector<8x128xf32>
      %18 = vector.broadcast %1 : vector<8x1xf32> to vector<8x128xf32>
      %19 = arith.addf %17, %18 : vector<8x128xf32>
      %20 = vector.extract_strided_slice %12 {offsets = [1, 0], sizes = [1, 128], strides = [1, 1]} : vector<4x128xf32> to vector<1x128xf32>
      %21 = vector.extract_strided_slice %0 {offsets = [0, 1], sizes = [8, 1], strides = [1, 1]} : vector<8x4xf32> to vector<8x1xf32>
      %22 = vector.broadcast %20 : vector<1x128xf32> to vector<8x128xf32>
      %23 = vector.broadcast %21 : vector<8x1xf32> to vector<8x128xf32>
      %24 = arith.mulf %22, %23 : vector<8x128xf32>
      %25 = arith.addf %19, %24 : vector<8x128xf32>
      %26 = vector.extract_strided_slice %12 {offsets = [2, 0], sizes = [1, 128], strides = [1, 1]} : vector<4x128xf32> to vector<1x128xf32>
      %27 = vector.extract_strided_slice %0 {offsets = [0, 2], sizes = [8, 1], strides = [1, 1]} : vector<8x4xf32> to vector<8x1xf32>
      %28 = vector.broadcast %26 : vector<1x128xf32> to vector<8x128xf32>
      %29 = vector.broadcast %27 : vector<8x1xf32> to vector<8x128xf32>
      %30 = arith.mulf %28, %29 : vector<8x128xf32>
      %31 = arith.addf %25, %30 : vector<8x128xf32>
      %32 = vector.extract_strided_slice %12 {offsets = [3, 0], sizes = [1, 128], strides = [1, 1]} : vector<4x128xf32> to vector<1x128xf32>
      %33 = vector.extract_strided_slice %0 {offsets = [0, 3], sizes = [8, 1], strides = [1, 1]} : vector<8x4xf32> to vector<8x1xf32>
      %34 = vector.broadcast %32 : vector<1x128xf32> to vector<8x128xf32>
      %35 = vector.broadcast %33 : vector<8x1xf32> to vector<8x128xf32>
      %36 = arith.mulf %34, %35 : vector<8x128xf32>
      %37 = arith.addf %31, %36 : vector<8x128xf32>
      %38 = arith.index_cast %4 : i32 to index
      %c0_10 = arith.constant 0 : index
      %39 = arith.index_cast %8 : i32 to index
      %40 = vector.load %arg5[%38, %c0_10, %39] : memref<2x8x128xf32, #tpu.memory_space<vmem>>, vector<1x8x128xf32>
      %41 = vector.shape_cast %40 : vector<1x8x128xf32> to vector<8x128xf32>
      %42 = vector.shape_cast %37 : vector<8x128xf32> to vector<1x8x128xf32>
      tpu.vector_store %arg5[%38, %c0_10, %39], %42 {strides = array<i32>} : memref<2x8x128xf32, #tpu.memory_space<vmem>>, vector<1x8x128xf32>,
      %c1_i32_11 = arith.constant 1 : i32
    }
    %c2_i32_3 = arith.constant 2 : i32
    return
  }
  func.func @transform_0(%arg0: i32, %arg1: i32) -> (i32, i32, i32) {
    %c0_i32 = arith.constant 0 : i32
    %c0_i32_0 = arith.constant 0 : i32
    return %arg0, %c0_i32, %arg1 : i32, i32, i32
  }
  func.func @transform_1(%arg0: i32, %arg1: i32) -> (i32, i32) {
    %c0_i32 = arith.constant 0 : i32
    %c0_i32_0 = arith.constant 0 : i32
    %c0_i32_1 = arith.constant 0 : i32
    return %c0_i32, %c0_i32_0 : i32, i32
  }
  func.func @transform_2(%arg0: i32, %arg1: i32) -> (i32, i32) {
    %c0_i32 = arith.constant 0 : i32
    %c0_i32_0 = arith.constant 0 : i32
    %c0_i32_1 = arith.constant 0 : i32
    return %c0_i32, %c0_i32_0 : i32, i32
  }
  func.func @transform_3(%arg0: i32, %arg1: i32) -> (i32, i32, i32) {
    %c0_i32 = arith.constant 0 : i32
    %c0_i32_0 = arith.constant 0 : i32
    return %arg0, %c0_i32, %arg1 : i32, i32, i32
  }
}

</mosaic_0001>

<llo_original>
// kernel: tpu_custom_call.1
$region0: #{tpu_custom_call.1}
  #allocation0 [shape = 'u32[]', space=smem, size = 0x4, offset = 0x4, fixed_abs, tag = 'smem constant byte address 0x4 - core index']
  #allocation1 [shape = 'u32[144,128]{1,0:T(1,128)}', space=vmem, size = 0x12000, scoped, tag = 'internal scratch']
  %s0 = inlined_call_operand.vmem [shape: f32[2,4,256], index: 0, kind: input, shape index: {}]
  %s1 = inlined_call_operand.vmem [shape: f32[8,4], index: 1, kind: input, shape index: {}]
  %s2 = inlined_call_operand.vmem [shape: f32[8,1], index: 2, kind: input, shape index: {}]
  %s3 = inlined_call_operand.hbm [shape: f32[2,8,256], index: 3, kind: output, shape index: {}]
  %s4 = sld [smem:[#allocation0]]
  $region93: #{tpu_custom_call.1} parent=0
    _
  %s6 = ssub.s32 1, %s4
  %s7 = scalar_select 0, %s6, %s4
  $region1: #{tpu_custom_call.1} parent=0
    #allocation2 [shape = 'u8[8192]{0}', space=vmem, size = 0x2000, scoped, tag = 'input window, operand 0']
    #allocation3 [shape = 'u8[16384]{0}', space=vmem, size = 0x4000, scoped, tag = 'output window, operand 0']
    #allocation4 [shape = 's32[2]{0}', space=sflag, size = 0x8, scoped, tag = 'scoped memory for tpu_custom_call.1']
    %8 = vsyncpa [#allocation4], 0
    %s9 = scalar_lea.sflag [#allocation4], 1
    %10 = vsyncpa %s9, 0
    loop: start=0, step=1, limit=4
    $region2: #{tpu_custom_call.1} parent=1 // loop_pre_header
      _
    $region3: #{tpu_custom_call.1} parent=1 // loop_header
      %s12 = sphi 0, %s16
      %p13 = scmp.ge.s32.totalorder %s12, 4
      %s19 = sphi 0, %s31
      %s20 = sphi 0, %s27
      %s21 = sphi 0, %s19
      %s22 = sphi 0, %s20
      %s23 = sphi 0, %s21
      %s24 = sphi 0, %s22
      %s36 = sphi 0, %s38
      %s39 = sphi 0, %s36
      %s40 = sphi 0, %s39
      %s56 = sphi 0, %s40
      %s60 = sphi 0, %s60
      %s62 = sphi 0, %s60
      %s63 = sphi 0, %s62
      %s77 = sphi 0, %s63
      %s81 = sphi 0, %s81
      %s83 = sphi 0, %s81
      %s84 = sphi 0, %s83
      %s98 = sphi 0, %s84
      %s106 = sphi 0, %s108
      %s109 = sphi 0, %s106
      %s110 = sphi 0, %s109
      %s126 = sphi 0, %s110
    $region4: #{tpu_custom_call.1} parent=1 // loop_header_branch
      %15 = sbr.rel (%p13) target = $region8
    $region5: #{tpu_custom_call.1} parent=1 // loop_body
      %s17 = ssub.s32 %s12, 1
      %s18 = ssub.s32 %s12, 2
      %s25 = sadd.s32 1, %s20
      %p26 = scmp.ge.s32.totalorder %s25, 2
      %s27 = scalar_select %p26, 0, %s25
      %s28 = sadd.s32 1, %s19
      %s29 = scalar_select %p26, %s28, %s19
      %p30 = scmp.ge.s32.totalorder %s29, 1
      %s31 = scalar_select %p30, 0, %s29
      %s32 = ssub.s32 %s19, %s31
      %s33 = ssub.s32 %s20, %s27
      %s34 = sor.u32 %s32, %s33
      %p35 = scmp.eq.s32.totalorder %s34, 0
      %s37 = sadd.s32 %s36, 1
      %s38 = scalar_select %p35, %s36, %s37
      %p41 = pneg %p35
      %p42 = scmp.eq.s32.totalorder %s12, 1
      %p43 = por %p41, %p42
      %p44 = scmp.ne.s32.totalorder %s36, %s39
      %p45 = scmp.eq.s32.totalorder %s12, 0
      %p46 = por %p44, %p45
      %p47 = scmp.ne.s32.totalorder %s36, %s39
      %p48 = scmp.eq.s32.totalorder %s17, 1
      %p49 = por %p47, %p48
      %p50 = scmp.ne.s32.totalorder %s39, %s40
      %p51 = scmp.eq.s32.totalorder %s17, 0
      %p52 = por %p50, %p51
      %p53 = scmp.ne.s32.totalorder %s39, %s40
      %p54 = scmp.eq.s32.totalorder %s18, 1
      %p55 = por %p53, %p54
      %p57 = scmp.ne.s32.totalorder %s40, %s56
      %p58 = scmp.eq.s32.totalorder %s18, 0
      %p59 = por %p57, %p58
      %s61 = sadd.s32 %s60, 1
      %p64 = scmp.eq.s32.totalorder %s12, 1
      %p65 = scmp.ne.s32.totalorder %s60, %s62
      %p66 = scmp.eq.s32.totalorder %s12, 0
      %p67 = por %p65, %p66
      %p68 = scmp.ne.s32.totalorder %s60, %s62
      %p69 = scmp.eq.s32.totalorder %s17, 1
      %p70 = por %p68, %p69
      %p71 = scmp.ne.s32.totalorder %s62, %s63
      %p72 = scmp.eq.s32.totalorder %s17, 0
      %p73 = por %p71, %p72
      %p74 = scmp.ne.s32.totalorder %s62, %s63
      %p75 = scmp.eq.s32.totalorder %s18, 1
      %p76 = por %p74, %p75
      %p78 = scmp.ne.s32.totalorder %s63, %s77
      %p79 = scmp.eq.s32.totalorder %s18, 0
      %p80 = por %p78, %p79
      %s82 = sadd.s32 %s81, 1
      %p85 = scmp.eq.s32.totalorder %s12, 1
      %p86 = scmp.ne.s32.totalorder %s81, %s83
      %p87 = scmp.eq.s32.totalorder %s12, 0
      %p88 = por %p86, %p87
      %p89 = scmp.ne.s32.totalorder %s81, %s83
      %p90 = scmp.eq.s32.totalorder %s17, 1
      %p91 = por %p89, %p90
      %p92 = scmp.ne.s32.totalorder %s83, %s84
      %p93 = scmp.eq.s32.totalorder %s17, 0
      %p94 = por %p92, %p93
      %p95 = scmp.ne.s32.totalorder %s83, %s84
      %p96 = scmp.eq.s32.totalorder %s18, 1
      %p97 = por %p95, %p96
      %p99 = scmp.ne.s32.totalorder %s84, %s98
      %p100 = scmp.eq.s32.totalorder %s18, 0
      %p101 = por %p99, %p100
      %s102 = ssub.s32 %s19, %s31
      %s103 = ssub.s32 %s20, %s27
      %s104 = sor.u32 %s102, %s103
      %p105 = scmp.eq.s32.totalorder %s104, 0
      %s107 = sadd.s32 %s106, 1
      %s108 = scalar_select %p105, %s106, %s107
      %p111 = pneg %p105
      %p112 = scmp.eq.s32.totalorder %s12, 1
      %p113 = por %p111, %p112
      %p114 = scmp.ne.s32.totalorder %s106, %s109
      %p115 = scmp.eq.s32.totalorder %s12, 0
      %p116 = por %p114, %p115
      %p117 = scmp.ne.s32.totalorder %s106, %s109
      %p118 = scmp.eq.s32.totalorder %s17, 1
      %p119 = por %p117, %p118
      %p120 = scmp.ne.s32.totalorder %s109, %s110
      %p121 = scmp.eq.s32.totalorder %s17, 0
      %p122 = por %p120, %p121
      %p123 = scmp.ne.s32.totalorder %s109, %s110
      %p124 = scmp.eq.s32.totalorder %s18, 1
      %p125 = por %p123, %p124
      %p127 = scmp.ne.s32.totalorder %s110, %s126
      %p128 = scmp.eq.s32.totalorder %s18, 0
      %p129 = por %p127, %p128
      %p130 = scmp.le.s32.totalorder 1, %s12
      %p131 = scmp.lt.s32.totalorder %s12, 3
      %p132 = pnand %p130, %p131
      %p133 = pneg %p132
      // Predicated region
      $region9: #{tpu_custom_call.1} parent=5 // pred_check
        _
      $region10: #{tpu_custom_call.1} parent=5 // pred_check_branch
        %135 = sbr.rel (%p132) target = $region12
      $region11: #{tpu_custom_call.1} parent=5 // pred_region
        %s136 = ssub.s32 %s12, 1
        // Predicated region
        $region13: #{tpu_custom_call.1} parent=11 // pred_check
          %p137 = pneg %p73
        $region14: #{tpu_custom_call.1} parent=11 // pred_check_branch
          %139 = sbr.rel (%p137) target = $region16
        $region15: #{tpu_custom_call.1} parent=11 // pred_region
          _
        $region16: #{tpu_custom_call.1} parent=11 // pred_fallthru
          _
        // Predicated region
        $region17: #{tpu_custom_call.1} parent=11 // pred_check
          %p140 = pneg %p94
        $region18: #{tpu_custom_call.1} parent=11 // pred_check_branch
          %142 = sbr.rel (%p140) target = $region20
        $region19: #{tpu_custom_call.1} parent=11 // pred_region
          _
        $region20: #{tpu_custom_call.1} parent=11 // pred_fallthru
          _
      $region12: #{tpu_custom_call.1} parent=5 // pred_fallthru
        _
      %p143 = scmp.lt.s32.totalorder %s12, 2
      // Predicated region
      $region21: #{tpu_custom_call.1} parent=5 // pred_check
        %p144 = pneg %p143
      $region22: #{tpu_custom_call.1} parent=5 // pred_check_branch
        %146 = sbr.rel (%p144) target = $region24
      $region23: #{tpu_custom_call.1} parent=5 // pred_region
        // Predicated region
        $region25: #{tpu_custom_call.1} parent=23 // pred_check
          %p147 = pneg %p46
        $region26: #{tpu_custom_call.1} parent=23 // pred_check_branch
          %149 = sbr.rel (%p147) target = $region28
        $region27: #{tpu_custom_call.1} parent=23 // pred_region
          %s150 = sand.u32 %s36, 1
          %s151 = sand.u32 %s36, 1
          %s152 = smul.addr %s151, 8
          %s153 = scalar_lea.vmem [#allocation2], %s152
          %s154 = smul.u32 2, %s19
          %s155 = smul.addr %s154, 2
          %s156 = sadd.s32 %s20, %s155
          %s157 = smul.addr %s156, 4
          %s158 = scalar_lea.vmem %s0, %s157
          // Predicated region
          $region29: #{tpu_custom_call.1} parent=27 // pred_check
            _
          $region30: #{tpu_custom_call.1} parent=27 // pred_check_branch
            %160 = sbr.rel (0) target = $region32
          $region31: #{tpu_custom_call.1} parent=27 // pred_region
            // Predicated region
            $region33: #{tpu_custom_call.1} parent=31 // pred_check
              _
            $region34: #{tpu_custom_call.1} parent=31 // pred_check_branch
              %162 = sbr.rel target = $region36
            $region35: #{tpu_custom_call.1} parent=31 // pred_region
              // Predicated region
              $region48: #{tpu_custom_call.1} parent=35 // pred_check
                _
              $region49: #{tpu_custom_call.1} parent=35 // pred_check_branch
                %179 = sbr.rel (0) target = $region51
              $region50: #{tpu_custom_call.1} parent=35 // pred_region
                loop: start=0, step=1, limit=1
                $region52: #{tpu_custom_call.1} parent=50 // loop_pre_header
                  _
                $region53: #{tpu_custom_call.1} parent=50 // loop_header
                  %s181 = sphi 0, %s185
                  %p182 = scmp.ge.s32.totalorder %s181, 1
                  %s186 = sphi %s158, %s158
                  %s187 = sphi %s153, %s153
                $region54: #{tpu_custom_call.1} parent=50 // loop_header_branch
                  %184 = sbr.rel (%p182) target = $region58
                $region55: #{tpu_custom_call.1} parent=50 // loop_body
                  _
                $region56: #{tpu_custom_call.1} parent=50 // loop_footer
                  %s185 = sadd.s32 1, %s181
                $region57: #{tpu_custom_call.1} parent=50 // loop_footer_branch
                  %180 = sbr.rel target = $region53
                $region58: #{tpu_custom_call.1} parent=50 // loop_exit
                  _
                loop: start=0, step=1, limit=1
                $region59: #{tpu_custom_call.1} parent=50 // loop_pre_header
                  _
                $region60: #{tpu_custom_call.1} parent=50 // loop_header
                  %s190 = sphi 0, %s194
                  %p191 = scmp.ge.s32.totalorder %s190, 1
                  %s195 = sphi %s158, %s158
                  %s196 = sphi %s153, %s153
                $region61: #{tpu_custom_call.1} parent=50 // loop_header_branch
                  %193 = sbr.rel (%p191) target = $region65
                $region62: #{tpu_custom_call.1} parent=50 // loop_body
                  %v197 = vld [vmem:[%s195] sm:$0xf]
                  %198 = vst [vmem:[%s196] sm:$0xf] %v197
                  %v199 = vld [vmem:[%s195 + $0x8] sm:$0xf]
                  %200 = vst [vmem:[%s196 + $0x4] sm:$0xf] %v199
                $region63: #{tpu_custom_call.1} parent=50 // loop_footer
                  %s194 = sadd.s32 1, %s190
                $region64: #{tpu_custom_call.1} parent=50 // loop_footer_branch
                  %189 = sbr.rel target = $region60
                $region65: #{tpu_custom_call.1} parent=50 // loop_exit
                  _
              $region51: #{tpu_custom_call.1} parent=35 // pred_fallthru
                _
            $region36: #{tpu_custom_call.1} parent=31 // pred_fallthru
              _
            // Predicated region
            $region37: #{tpu_custom_call.1} parent=31 // pred_check
              _
            $region38: #{tpu_custom_call.1} parent=31 // pred_check_branch
              %164 = sbr.rel (0) target = $region40
            $region39: #{tpu_custom_call.1} parent=31 // pred_region
              loop: start=0, step=1, limit=1
              $region41: #{tpu_custom_call.1} parent=39 // loop_pre_header
                _
              $region42: #{tpu_custom_call.1} parent=39 // loop_header
                %s167 = sphi 0, %s171
                %p168 = scmp.ge.s32.totalorder %s167, 1
                %s172 = sphi %s158, %s158
                %s173 = sphi %s153, %s153
              $region43: #{tpu_custom_call.1} parent=39 // loop_header_branch
                %170 = sbr.rel (%p168) target = $region47
              $region44: #{tpu_custom_call.1} parent=39 // loop_body
                %v174 = vld [vmem:[%s172] sm:$0xf]
                %175 = vst [vmem:[%s173] sm:$0xf] %v174
                %v176 = vld [vmem:[%s172 + $0x8] sm:$0xf]
                %177 = vst [vmem:[%s173 + $0x4] sm:$0xf] %v176
              $region45: #{tpu_custom_call.1} parent=39 // loop_footer
                %s171 = sadd.s32 1, %s167
              $region46: #{tpu_custom_call.1} parent=39 // loop_footer_branch
                %166 = sbr.rel target = $region42
              $region47: #{tpu_custom_call.1} parent=39 // loop_exit
                _
            $region40: #{tpu_custom_call.1} parent=31 // pred_fallthru
              _
          $region32: #{tpu_custom_call.1} parent=27 // pred_fallthru
            _
          %201 = vnop
        $region28: #{tpu_custom_call.1} parent=23 // pred_fallthru
          _
      $region24: #{tpu_custom_call.1} parent=5 // pred_fallthru
        _
      %p202 = scmp.le.s32.totalorder 1, %s12
      %p203 = scmp.lt.s32.totalorder %s12, 3
      %p204 = pnand %p202, %p203
      %p205 = pneg %p204
      // Predicated region
      $region66: #{tpu_custom_call.1} parent=5 // pred_check
        _
      $region67: #{tpu_custom_call.1} parent=5 // pred_check_branch
        %207 = sbr.rel (%p204) target = $region69
      $region68: #{tpu_custom_call.1} parent=5 // pred_region
        %s208 = ssub.s32 %s12, 1
        %s209 = sand.u32 %s39, 1
        %s210 = sand.u32 %s39, 1
        %s211 = smul.addr %s210, 8
        %s212 = scalar_lea.vmem [#allocation2], %s211
        // Predicated region
        $region70: #{tpu_custom_call.1} parent=68 // pred_check
          %p213 = pneg %p52
        $region71: #{tpu_custom_call.1} parent=68 // pred_check_branch
          %215 = sbr.rel (%p213) target = $region73
        $region72: #{tpu_custom_call.1} parent=68 // pred_region
          _
        $region73: #{tpu_custom_call.1} parent=68 // pred_fallthru
          _
        %s216 = sand.u32 %s39, 1
        %s217 = sand.u32 %s39, 1
        %s218 = smul.addr %s217, 8
        %s219 = scalar_lea.vmem [#allocation2], %s218
        %p220 = pneg %p52
        %p221 = pneg %p49
        %p222 = pneg %p73
        %p223 = pneg %p70
        %p224 = pneg %p94
        %p225 = pneg %p91
        %p226 = pneg %p122
        %p227 = pneg %p119
        %s228 = sand.u32 %s109, 1
        %s229 = scalar_lea.sflag [#allocation4], %s228
        %s230 = sand.u32 %s109, 1
        %s231 = smul.addr %s230, 16
        %s232 = scalar_lea.vmem [#allocation3], %s231
        %s233 = smul.u32 2, %s21
        %s234 = smul.u32 2, %s21
        %v235 = vld [vmem:[%s1] sm:$0xff]
        %v236 = vld [vmem:[%s2] sm:$0xff]
        loop: start=0, step=1, limit=2
        $region74: #{tpu_custom_call.1} parent=68 // loop_pre_header
          _
        $region75: #{tpu_custom_call.1} parent=68 // loop_header
          %s238 = sphi 0, %s242
          %p239 = scmp.ge.s32.totalorder %s238, 2
        $region76: #{tpu_custom_call.1} parent=68 // loop_header_branch
          %241 = sbr.rel (%p239) target = $region80
        $region77: #{tpu_custom_call.1} parent=68 // loop_body
          %s243 = smul.u32 %s238, 4
          %s244 = sadd.s32 0, %s243
          %s245 = scalar_lea.vmem %s212, %s244 [#allocation2]
          %v246 = vld [vmem:[%s245] sm:$0xf]
          %v247 = vlaneseq
          %v248 = vshrl.u32 %v247, 7
          %v249 = vsub.s32 0, %v248
          %v250 = vrot.slane %v246, %v249
          %252 = vset.pattern.permute.xlu0 0
          %253 = vperm.xlu0 %252, %v235
          %v254 = vpop.permute.xlu0 %253
          %v256 = vmul.f32 %v250, %v254
          %258 = vset.pattern.permute.xlu0 0
          %259 = vperm.xlu0 %258, %v236
          %v260 = vpop.permute.xlu0 %259
          %v262 = vadd.f32 %v256, %v260
          %v263 = vlaneseq
          %v264 = vshrl.u32 %v263, 7
          %v265 = vsub.s32 1, %v264
          %v266 = vrot.slane %v246, %v265
          %267 = vset.pattern.permute.xlu0 1
          %268 = vperm.xlu0 %267, %v235
          %v269 = vpop.permute.xlu0 %268
          %v271 = vmul.f32 %v266, %v269
          %v272 = vadd.f32 %v262, %v271
          %v273 = vlaneseq
          %v274 = vshrl.u32 %v273, 7
          %v275 = vsub.s32 2, %v274
          %v276 = vrot.slane %v246, %v275
          %277 = vset.pattern.permute.xlu0 2
          %278 = vperm.xlu0 %277, %v235
          %v279 = vpop.permute.xlu0 %278
          %v281 = vmul.f32 %v276, %v279
          %v282 = vadd.f32 %v272, %v281
          %v283 = vlaneseq
          %v284 = vshrl.u32 %v283, 7
          %v285 = vsub.s32 3, %v284
          %v286 = vrot.slane %v246, %v285
          %287 = vset.pattern.permute.xlu0 3
          %288 = vperm.xlu0 %287, %v235
          %v289 = vpop.permute.xlu0 %288
          %v291 = vmul.f32 %v286, %v289
          %v292 = vadd.f32 %v282, %v291
          %s293 = smul.u32 %s238, 8
          %s294 = sadd.s32 0, %s293
          %s295 = scalar_lea.vmem %s232, %s294 [#allocation3]
          %296 = vst [vmem:[%s295] sm:$0xff] %v292
        $region78: #{tpu_custom_call.1} parent=68 // loop_footer
          %s242 = sadd.s32 1, %s238
        $region79: #{tpu_custom_call.1} parent=68 // loop_footer_branch
          %237 = sbr.rel target = $region75
        $region80: #{tpu_custom_call.1} parent=68 // loop_exit
          _
        %s297 = sand.u32 %s109, 1
        %s298 = scalar_lea.sflag [#allocation4], %s297
        %s299 = sand.u32 %s109, 1
        %s300 = smul.addr %s299, 16
        %s301 = scalar_lea.vmem [#allocation3], %s300
        // Predicated region
        $region81: #{tpu_custom_call.1} parent=68 // pred_check
          %p302 = pneg %p119
        $region82: #{tpu_custom_call.1} parent=68 // pred_check_branch
          %304 = sbr.rel (%p302) target = $region84
        $region83: #{tpu_custom_call.1} parent=68 // pred_region
          %s305 = smul.u32 2, %s21
          %s307 = ssub.s32 256, 256
          %308 = vsyncadd %s298, %s307
          %s309 = smul.addr %s305, 2
          %s310 = sadd.s32 %s22, %s309
          %s311 = smul.addr %s310, 128
          %s312 = scalar_lea.hbm %s3, %s311
          %s313 = sshll.u32 %s301, 4
          %s314 = int_to_ptr.vmem [resolvable:$true] %s313
          %319 = dma.vmem_to_hbm [thread:$0]  %s314, 256, %s312, %s298, 128, 256, 8
        $region84: #{tpu_custom_call.1} parent=68 // pred_fallthru
          _
      $region69: #{tpu_custom_call.1} parent=5 // pred_fallthru
        _
      %p320 = scmp.le.s32.totalorder 2, %s12
      // Predicated region
      $region85: #{tpu_custom_call.1} parent=5 // pred_check
        %p321 = pneg %p320
      $region86: #{tpu_custom_call.1} parent=5 // pred_check_branch
        %323 = sbr.rel (%p321) target = $region88
      $region87: #{tpu_custom_call.1} parent=5 // pred_region
        %s324 = ssub.s32 %s12, 2
        // Predicated region
        $region89: #{tpu_custom_call.1} parent=87 // pred_check
          %p325 = pneg %p125
        $region90: #{tpu_custom_call.1} parent=87 // pred_check_branch
          %327 = sbr.rel (%p325) target = $region92
        $region91: #{tpu_custom_call.1} parent=87 // pred_region
          %s328 = sand.u32 %s110, 1
          %s329 = scalar_lea.sflag [#allocation4], %s328
          %s330 = sand.u32 %s110, 1
          %s331 = smul.addr %s330, 16
          %s332 = scalar_lea.vmem [#allocation3], %s331
          %333 = dma.done %s329, 256
        $region92: #{tpu_custom_call.1} parent=87 // pred_fallthru
          _
      $region88: #{tpu_custom_call.1} parent=5 // pred_fallthru
        _
    $region6: #{tpu_custom_call.1} parent=1 // loop_footer
      %s16 = sadd.s32 1, %s12
    $region7: #{tpu_custom_call.1} parent=1 // loop_footer_branch
      %11 = sbr.rel target = $region3
    $region8: #{tpu_custom_call.1} parent=1 // loop_exit
      _
    %334 = vsyncpa [#allocation4], 1
    %s335 = scalar_lea.sflag [#allocation4], 1
    %336 = vsyncpa %s335, 1

</llo_original>
